<compile_context>
chip_gen: v7x
topology: tpu7x:2x2x1
jax: 0.10.0
libtpu: 0.0.40
codegen_flags: <defaults>
</compile_context>

<pallas_src>
import jax
import jax.numpy as jnp
import numpy as np
from jax.experimental import pallas as pl
from jax.experimental.pallas import tpu as pltpu


def make_positional_encoding(d_model: int, max_len: int = 16, dtype=jnp.float32):
    """Replicates the PyTorch __init__ buffer construction (sinusoidal table)."""
    position = np.arange(0, max_len, dtype=np.float32)[:, None]                  # (max_len, 1)
    div_term = np.exp(np.arange(0, d_model, 2, dtype=np.float32)
                      * (-np.log(10000.0) / d_model))                            # (d_model//2,)
    pe = np.zeros((max_len, d_model), dtype=np.float32)
    pe[:, 0::2] = np.sin(position * div_term)
    pe[:, 1::2] = np.cos(position * div_term)
    return jnp.asarray(pe, dtype=dtype)                                          # (max_len, d_model)


def _pos_enc_kernel(x_ref, pe_ref, o_ref):
    # x_ref/o_ref: (b_tile, f_tile) lane-dense blocks; pe_ref: (1, f_tile) broadcast row
    # (resident in VMEM across batch tiles). Straight sublane-broadcast VPU add.
    o_ref[...] = (x_ref[...] + pe_ref[...]).astype(o_ref.dtype)


def _choose_tiles(B: int, F: int, itemsize: int, budget_bytes: int):
    """Largest blocks under budget that satisfy the (8,128)/full-extent BlockSpec rule."""
    # Lane (last) axis: take the full F if one row fits, else the largest
    # 128-multiple divisor of F that fits the budget.
    if F * itemsize <= budget_bytes:
        f_tile = F
    else:
        f_tile = None
        t = 128
        while t <= F:
            if F % t == 0 and t * itemsize <= budget_bytes:
                f_tile = t
            t += 128
        if f_tile is None:
            f_tile = F  # fallback: full row; vmem_limit_bytes below adds headroom
    # Sublane axis: as many batch rows as fit; must divide B and be a multiple of 8,
    # or equal the full batch extent.
    max_rows = max(1, budget_bytes // (f_tile * itemsize))
    if B <= max_rows:
        b_tile = B
    else:
        b_tile = B
        for t in range((max_rows // 8) * 8, 0, -8):
            if B % t == 0:
                b_tile = t
                break
    return b_tile, f_tile


def positional_encoding_forward(x: jax.Array, pe: jax.Array, *,
                                tile_budget_bytes: int = 4 * 1024 * 1024,
                                force_pallas: bool = False) -> jax.Array:
    """x: (B, S, D), pe: (max_len, D). Returns x + pe[None, :S, :]."""
    B, S, D = x.shape
    max_len, d_model = pe.shape
    if D != d_model:
        raise ValueError(f"d_model mismatch: x has D={D}, pe has {d_model}")
    if S > max_len:
        raise ValueError(f"sequence length {S} exceeds pe max_len {max_len}")

    pe_slice = pe[:S, :].astype(x.dtype)          # static slice + dtype match (glue in JAX)
    itemsize = np.dtype(x.dtype).itemsize
    total_bytes = B * S * D * itemsize

    # Tiny inputs: pallas_call launch/per-step overhead dwarfs a KiB-scale add.
    if not force_pallas and total_bytes < (1 << 20):
        return x + pe_slice[None, :, :]

    # Lane-dense 2-D view: fold (S, D) into one lane axis.
    F = S * D
    x2d = x.reshape(B, F)
    pe2d = pe_slice.reshape(1, F)                 # one broadcast row, NOT tiled over batch

    b_tile, f_tile = _choose_tiles(B, F, itemsize, tile_budget_bytes)
    grid = (B // b_tile, F // f_tile)

    tile_bytes = b_tile * f_tile * itemsize
    pe_tile_bytes = f_tile * itemsize
    # double-buffered x + out tiles, double-buffered pe block, plus headroom
    vmem_need = 2 * 2 * tile_bytes + 2 * pe_tile_bytes + (4 << 20)
    vmem_limit = int(min(max(vmem_need, 32 << 20), 60 << 20))   # stay inside v7x's 64 MiB

    out2d = pl.pallas_call(
        _pos_enc_kernel,
        out_shape=jax.ShapeDtypeStruct((B, F), x.dtype),
        grid_spec=pltpu.PrefetchScalarGridSpec(
            num_scalar_prefetch=0,
            grid=grid,
            in_specs=[
                pl.BlockSpec((b_tile, f_tile), lambda i, j: (i, j)),   # x tile
                pl.BlockSpec((1, f_tile), lambda i, j: (0, j)),        # pe row, resident over i
            ],
            out_specs=pl.BlockSpec((b_tile, f_tile), lambda i, j: (i, j)),
        ),
        compiler_params=pltpu.CompilerParams(
            dimension_semantics=("parallel", "parallel"),
            vmem_limit_bytes=vmem_limit,
        ),
    )(x2d, pe2d)

    return out2d.reshape(B, S, D)


if __name__ == "__main__":
    B, S, D = 2, 8, 32          # batch, seq_len, d_model (seq <= max_len)
    MAX_LEN = 16

    key = jax.random.PRNGKey(0)
    x = jax.random.normal(key, (B, S, D), dtype=jnp.float32)
    pe = make_positional_encoding(D, MAX_LEN)

    # force_pallas=True so the kernel path is exercised even at this toy size
    out = positional_encoding_forward(x, pe, force_pallas=True)
    out = jax.block_until_ready(out)

    # correctness check against plain-JAX reference
    ref = x + pe[None, :S, :]
    np.testing.assert_allclose(np.asarray(out), np.asarray(ref), rtol=1e-6, atol=1e-6)

    print("KERNEL_OK")
</pallas_src>

<mosaic_0001>
module attributes {stable_mosaic.version = 11 : i64} {
  func.func @_pos_enc_kernel(%arg0: i32, %arg1: i32, %arg2: memref<2x256xf32, #tpu.memory_space<vmem>>, %arg3: memref<1x256xf32, #tpu.memory_space<vmem>>, %arg4: memref<2x256xf32, #tpu.memory_space<vmem>>) attributes {dimension_semantics = [#tpu.dimension_semantics<parallel>, #tpu.dimension_semantics<parallel>], iteration_bounds = array<i64: 1, 1>, scalar_prefetch = 0 : i64, scratch_operands = 0 : i64, tpu.core_type = #tpu.core_type<tc>, window_params = [{transform_indices = @transform_0, window_bounds = array<i64: 2, 256>}, {transform_indices = @transform_1, window_bounds = array<i64: 1, 256>}, {transform_indices = @transform_2, window_bounds = array<i64: 2, 256>}]} {
    %c0 = arith.constant 0 : index
    %c0_0 = arith.constant 0 : index
    %0 = vector.load %arg2[%c0, %c0_0] : memref<2x256xf32, #tpu.memory_space<vmem>>, vector<2x256xf32>
    %c0_1 = arith.constant 0 : index
    %c0_2 = arith.constant 0 : index
    %1 = vector.load %arg3[%c0_1, %c0_2] : memref<1x256xf32, #tpu.memory_space<vmem>>, vector<1x256xf32>
    %2 = vector.broadcast %1 : vector<1x256xf32> to vector<2x256xf32>
    %3 = arith.addf %0, %2 : vector<2x256xf32>
    %c0_3 = arith.constant 0 : index
    %c0_4 = arith.constant 0 : index
    %4 = vector.load %arg4[%c0_3, %c0_4] : memref<2x256xf32, #tpu.memory_space<vmem>>, vector<2x256xf32>
    tpu.vector_store %arg4[%c0_3, %c0_4], %3 {strides = array<i32>} : memref<2x256xf32, #tpu.memory_space<vmem>>, vector<2x256xf32>,
    return
  }
  func.func @transform_0(%arg0: i32, %arg1: i32) -> (i32, i32) {
    %c0_i32 = arith.constant 0 : i32
    return %arg0, %arg1 : i32, i32
  }
  func.func @transform_1(%arg0: i32, %arg1: i32) -> (i32, i32) {
    %c0_i32 = arith.constant 0 : i32
    %c0_i32_0 = arith.constant 0 : i32
    return %c0_i32, %arg1 : i32, i32
  }
  func.func @transform_2(%arg0: i32, %arg1: i32) -> (i32, i32) {
    %c0_i32 = arith.constant 0 : i32
    return %arg0, %arg1 : i32, i32
  }
}

</mosaic_0001>

<llo_original>
// kernel: tpu_custom_call.1
$region0: #{tpu_custom_call.1}
  #allocation0 [shape = 'u32[]', space=smem, size = 0x4, offset = 0x4, fixed_abs, tag = 'smem constant byte address 0x4 - core index']
  #allocation1 [shape = 'u32[144,128]{1,0:T(1,128)}', space=vmem, size = 0x12000, scoped, tag = 'internal scratch']
  %s0 = inlined_call_operand.hbm [shape: f32[2,256], index: 0, kind: input, shape index: {}]
  %s1 = inlined_call_operand.vmem [shape: f32[1,256], index: 1, kind: input, shape index: {}]
  %s2 = inlined_call_operand.hbm [shape: f32[2,256], index: 2, kind: output, shape index: {}]
  %s3 = sld [smem:[#allocation0]]
  $region22: #{tpu_custom_call.1} parent=0
    _
  %s5 = ssub.s32 1, %s3
  %s6 = scalar_select 0, %s5, %s3
  $region1: #{tpu_custom_call.1} parent=0
    #allocation2 [shape = 'u8[2048]{0}', space=vmem, size = 0x800, scoped, tag = 'input window, operand 0, single buffered']
    #allocation3 [shape = 's32[1]{0}', space=sflag, size = 0x4, scoped, tag = 'scoped memory for tpu_custom_call.1']
    #allocation4 [shape = 's32[1]{0}', space=sflag, size = 0x4, scoped, tag = 'scoped memory for tpu_custom_call.1']
    #allocation5 [shape = 'u8[2048]{0}', space=vmem, size = 0x800, scoped, tag = 'output window, operand 0, single buffered']
    %7 = vsyncpa [#allocation3], 0
    %8 = vsyncpa [#allocation4], 0
    // Predicated region
    $region2: #{tpu_custom_call.1} parent=1 // pred_check
      _
    $region3: #{tpu_custom_call.1} parent=1 // pred_check_branch
      %10 = sbr.rel (0) target = $region5
    $region4: #{tpu_custom_call.1} parent=1 // pred_region
      %s12 = ssub.s32 64, 64
      %13 = vsyncadd [#allocation3], %s12
      %s15 = sshll.u32 [#allocation2], 4
      %s16 = int_to_ptr.vmem [resolvable:$true] %s15
      %18 = dma.hbm_to_vmem [thread:$0]  %s0, 64, %s16, [#allocation3]
    $region5: #{tpu_custom_call.1} parent=1 // pred_fallthru
      _
    // Predicated region
    $region6: #{tpu_custom_call.1} parent=1 // pred_check
      _
    $region7: #{tpu_custom_call.1} parent=1 // pred_check_branch
      %20 = sbr.rel (0) target = $region9
    $region8: #{tpu_custom_call.1} parent=1 // pred_region
      _
    $region9: #{tpu_custom_call.1} parent=1 // pred_fallthru
      _
    // Predicated region
    $region10: #{tpu_custom_call.1} parent=1 // pred_check
      _
    $region11: #{tpu_custom_call.1} parent=1 // pred_check_branch
      %22 = sbr.rel (0) target = $region13
    $region12: #{tpu_custom_call.1} parent=1 // pred_region
      %23 = dma.done [#allocation3], 64
    $region13: #{tpu_custom_call.1} parent=1 // pred_fallthru
      _
    %v24 = vld [vmem:[#allocation2] sm:$0xf]
    %v25 = vld [vmem:[%s1] sm:$0x3]
    %v27 = vlaneseq
    %v28 = vshrl.u32 %v27, 7
    %v29 = vsub.s32 0, %v28
    %v30 = vrot.slane %v25, %v29
    %v31 = vlaneseq
    %v32 = vshrl.u32 %v31, 7
    %v33 = vsub.s32 1, %v32
    %v34 = vrot.slane %v25, %v33
    %v35 = vcombine.low %v30, %v34
    %v37 = vunpack.c.l.s4 1983009808
    %v38 = vunpack.c.0.s8 %v37
    %v39 = vlaneseq
    %v40 = vshrl.u32 %v39, 7
    %v41 = vsub.s32 %v38, %v40
    %v42 = vrot.slane %v35, %v41
    %v44 = vadd.f32 %v24, %v42
    %45 = vst [vmem:[#allocation5] sm:$0xf] %v44
    // Predicated region
    $region14: #{tpu_custom_call.1} parent=1 // pred_check
      _
    $region15: #{tpu_custom_call.1} parent=1 // pred_check_branch
      %47 = sbr.rel (0) target = $region17
    $region16: #{tpu_custom_call.1} parent=1 // pred_region
      %s49 = ssub.s32 64, 64
      %50 = vsyncadd [#allocation4], %s49
      %s52 = sshll.u32 [#allocation5], 4
      %s53 = int_to_ptr.vmem [resolvable:$true] %s52
      %55 = dma.vmem_to_hbm [thread:$0]  %s53, 64, %s2, [#allocation4]
    $region17: #{tpu_custom_call.1} parent=1 // pred_fallthru
      _
    // Predicated region
    $region18: #{tpu_custom_call.1} parent=1 // pred_check
      _
    $region19: #{tpu_custom_call.1} parent=1 // pred_check_branch
      %57 = sbr.rel (0) target = $region21
    $region20: #{tpu_custom_call.1} parent=1 // pred_region
      %58 = dma.done [#allocation4], 64
    $region21: #{tpu_custom_call.1} parent=1 // pred_fallthru
      _
    %59 = vsyncpa [#allocation3], 1
    %60 = vsyncpa [#allocation4], 1

</llo_original>
